<compile_context>
chip_gen: v7x
topology: tpu7x:2x2x1
jax: 0.10.0
libtpu: 0.0.40
codegen_flags: <defaults>
</compile_context>

<pallas_src>
import math

import jax
import jax.numpy as jnp
from jax import lax
from jax.experimental import pallas as pl
from jax.experimental.pallas import tpu as pltpu


# ---------------------------------------------------------------------------
# Kernel 1: sigma/mu projection, tiled over the output (D) axis.
#   s = y @ Ws^T + bs ,  m = y @ Wm^T + bm   (weights in PyTorch (D, Di) layout)
# ---------------------------------------------------------------------------
def _adain_proj_kernel(y_ref, ws_ref, bs_ref, wm_ref, bm_ref, s_ref, m_ref):
    y = y_ref[...]                                    # (B, Di)
    dn = (((1,), (1,)), ((), ()))                     # contract last axes (= y @ W^T)
    s = lax.dot_general(y, ws_ref[...], dn,
                        preferred_element_type=jnp.float32) + bs_ref[...]
    m = lax.dot_general(y, wm_ref[...], dn,
                        preferred_element_type=jnp.float32) + bm_ref[...]
    s_ref[...] = s                                    # f32 outputs
    m_ref[...] = m


# ---------------------------------------------------------------------------
# Kernel 2: HBM-streaming modulation  out = x * s + m  (s, m broadcast over S)
# s_ref/m_ref hold the whole (B, D) table resident in VMEM; the per-batch row
# is selected with program_id so they are DMA'd once per call, not per step.
# ---------------------------------------------------------------------------
def _adain_modulate_kernel(x_ref, s_ref, m_ref, o_ref):
    b = pl.program_id(1)
    s = s_ref[pl.ds(b, 1), :]                         # (1, D) f32
    m = m_ref[pl.ds(b, 1), :]                         # (1, D) f32
    o_ref[...] = (x_ref[...] * s + m).astype(o_ref.dtype)


# ---------------------------------------------------------------------------
# Tiling helpers
# ---------------------------------------------------------------------------
def _pick_seq_tile(S, D, itemsize, target_bytes=8 << 20):
    """Rows per sequence tile: ~8 MiB per buffer, multiple of the packed
    sublane count of the dtype (8 f32 / 16 bf16 / 32 int8), <= S."""
    sub = max(8, 32 // max(1, itemsize))
    rows = max(sub, target_bytes // max(1, D * itemsize))
    rows = (rows // sub) * sub
    if rows >= S:
        return S                    # full-extent block (always legal)
    return rows


def _pick_proj_tile(D, Di, itemsize, target_bytes=2 << 20):
    """Output-axis tile for the projection: multiple of 128, ~2 MiB weight tile."""
    tn = target_bytes // max(1, Di * itemsize)
    tn = max(128, (tn // 128) * 128)
    return D if tn >= D else tn


def _fold_lane_factor(S, D):
    """k such that (k*D) % 128 == 0 and k divides S (1 if D already lane-dense)."""
    if D % 128 == 0:
        return 1
    k = 128 // math.gcd(D, 128)
    return k if (S % k == 0) else 1


# ---------------------------------------------------------------------------
# Wrapper
# ---------------------------------------------------------------------------
def adain(x, y, w_sigma, b_sigma, w_mu, b_mu):
    """x: (B, S, D); y: (B, Di); w_*: (D, Di) (PyTorch layout); b_*: (D,)."""
    B, S, D = x.shape
    Di = y.shape[-1]

    # --- projection: tiled over the output axis, weights in PyTorch layout ---
    w_item = w_sigma.dtype.itemsize
    tn = _pick_proj_tile(D, Di, w_item)
    proj_vmem = (2 * B * Di * y.dtype.itemsize        # y (resident, dbl-buf bound)
                 + 4 * tn * Di * w_item               # 2 weights x 2 buffers
                 + 4 * B * tn * 4                     # 2 f32 outputs x 2 buffers
                 + 8 * tn * 4                         # biases
                 + (2 << 20))                         # margin
    proj_vmem = int(min(max(proj_vmem, 16 << 20), 48 << 20))

    s, m = pl.pallas_call(
        _adain_proj_kernel,
        out_shape=(jax.ShapeDtypeStruct((B, D), jnp.float32),
                   jax.ShapeDtypeStruct((B, D), jnp.float32)),
        grid=(pl.cdiv(D, tn),),
        in_specs=[
            pl.BlockSpec((B, Di), lambda n: (0, 0)),    # y (resident)
            pl.BlockSpec((tn, Di), lambda n: (n, 0)),   # W_sigma (D, Di)
            pl.BlockSpec((1, tn), lambda n: (0, n)),    # b_sigma
            pl.BlockSpec((tn, Di), lambda n: (n, 0)),   # W_mu (D, Di)
            pl.BlockSpec((1, tn), lambda n: (0, n)),    # b_mu
        ],
        out_specs=(pl.BlockSpec((B, tn), lambda n: (0, n)),
                   pl.BlockSpec((B, tn), lambda n: (0, n))),
        compiler_params=pltpu.CompilerParams(
            dimension_semantics=("parallel",),
            vmem_limit_bytes=proj_vmem),
    )(y, w_sigma, b_sigma.reshape(1, D), w_mu, b_mu.reshape(1, D))

    # --- lane-density fold for small D (production D is a multiple of 128) ---
    k = _fold_lane_factor(S, D)
    if k > 1:
        x_eff = x.reshape(B, S // k, k * D)             # contiguous, no transpose
        s_eff = jnp.tile(s, (1, k))
        m_eff = jnp.tile(m, (1, k))
    else:
        x_eff, s_eff, m_eff = x, s, m
    S_eff, D_eff = x_eff.shape[1], x_eff.shape[2]

    # --- streaming modulation, sequence-tiled -------------------------------
    ts = _pick_seq_tile(S_eff, D_eff, x.dtype.itemsize)
    tile_bytes = ts * D_eff * x.dtype.itemsize
    sm_bytes = B * D_eff * 4
    mod_vmem = int(min(max(4 * tile_bytes + 4 * sm_bytes + (2 << 20), 16 << 20),
                       48 << 20))

    # Seq-tile axis leads so megacore (v7x) gets an even split even for B==1.
    out = pl.pallas_call(
        _adain_modulate_kernel,
        out_shape=jax.ShapeDtypeStruct((B, S_eff, D_eff), x.dtype),
        grid=(pl.cdiv(S_eff, ts), B),
        in_specs=[
            pl.BlockSpec((pl.Squeezed(), ts, D_eff), lambda si, b: (b, si, 0)),  # x
            pl.BlockSpec((B, D_eff), lambda si, b: (0, 0)),                      # sigma(y)
            pl.BlockSpec((B, D_eff), lambda si, b: (0, 0)),                      # mu(y)
        ],
        out_specs=pl.BlockSpec((pl.Squeezed(), ts, D_eff), lambda si, b: (b, si, 0)),
        compiler_params=pltpu.CompilerParams(
            dimension_semantics=("parallel", "parallel"),
            vmem_limit_bytes=mod_vmem),
    )(x_eff, s_eff, m_eff)

    return out.reshape(B, S, D) if k > 1 else out


if __name__ == "__main__":
    # Small shapes consistent with the module's forward.
    B, S = 2, 8
    dims = 32               # AdaIn(dims=...)
    intermediate_dims = 64  # config.intermediate_dims (small for the test)

    key = jax.random.PRNGKey(0)
    kx, ky, kws, kbs, kwm, kbm = jax.random.split(key, 6)

    x = jax.random.normal(kx, (B, S, dims), dtype=jnp.float32)
    y = jax.random.normal(ky, (B, intermediate_dims), dtype=jnp.float32)

    # Deterministic parameter init (PyTorch Linear weight layout: (out, in)).
    scale = 1.0 / jnp.sqrt(intermediate_dims)
    w_sigma = jax.random.uniform(kws, (dims, intermediate_dims),
                                 minval=-scale, maxval=scale, dtype=jnp.float32)
    b_sigma = jax.random.uniform(kbs, (dims,), minval=-scale, maxval=scale,
                                 dtype=jnp.float32)
    w_mu = jax.random.uniform(kwm, (dims, intermediate_dims),
                              minval=-scale, maxval=scale, dtype=jnp.float32)
    b_mu = jax.random.uniform(kbm, (dims,), minval=-scale, maxval=scale,
                              dtype=jnp.float32)

    out = adain(x, y, w_sigma, b_sigma, w_mu, b_mu)
    out = jax.block_until_ready(out)

    # Reference check in plain JAX (same semantics as the PyTorch forward).
    s_ref = y @ w_sigma.T + b_sigma    # (B, dims)
    m_ref = y @ w_mu.T + b_mu          # (B, dims)
    ref = x * s_ref[:, None, :] + m_ref[:, None, :]
    assert jnp.allclose(out, ref, atol=1e-5, rtol=1e-5), "mismatch vs reference"

    print("KERNEL_OK")
</pallas_src>

<mosaic_0001>
module attributes {stable_mosaic.version = 11 : i64} {
  func.func @_adain_proj_kernel(%arg0: i32, %arg1: memref<2x64xf32, #tpu.memory_space<vmem>>, %arg2: memref<32x64xf32, #tpu.memory_space<vmem>>, %arg3: memref<1x32xf32, #tpu.memory_space<vmem>>, %arg4: memref<32x64xf32, #tpu.memory_space<vmem>>, %arg5: memref<1x32xf32, #tpu.memory_space<vmem>>, %arg6: memref<2x32xf32, #tpu.memory_space<vmem>>, %arg7: memref<2x32xf32, #tpu.memory_space<vmem>>) attributes {dimension_semantics = [#tpu.dimension_semantics<parallel>], iteration_bounds = array<i64: 1>, scalar_prefetch = 0 : i64, scratch_operands = 0 : i64, tpu.core_type = #tpu.core_type<tc>, window_params = [{pipeline_mode = #tpu.pipeline_mode<synchronous>, transform_indices = @transform_0, window_bounds = array<i64: 2, 64>}, {transform_indices = @transform_1, window_bounds = array<i64: 32, 64>}, {transform_indices = @transform_2, window_bounds = array<i64: 1, 32>}, {transform_indices = @transform_3, window_bounds = array<i64: 32, 64>}, {transform_indices = @transform_4, window_bounds = array<i64: 1, 32>}, {transform_indices = @transform_5, window_bounds = array<i64: 2, 32>}, {transform_indices = @transform_6, window_bounds = array<i64: 2, 32>}]} {
    %c0 = arith.constant 0 : index
    %c0_0 = arith.constant 0 : index
    %0 = vector.load %arg1[%c0, %c0_0] : memref<2x64xf32, #tpu.memory_space<vmem>>, vector<2x64xf32>
    %c0_1 = arith.constant 0 : index
    %c0_2 = arith.constant 0 : index
    %1 = vector.load %arg2[%c0_1, %c0_2] : memref<32x64xf32, #tpu.memory_space<vmem>>, vector<32x64xf32>
    %cst = arith.constant dense<0.000000e+00> : vector<2x32xf32>
    %2 = tpu.matmul %0, %1, %cst {dimension_numbers = #tpu.dot_dimension_numbers<[1], [1], [0], [0], [0, 0, 1, 0], [], []>} : vector<2x64xf32>, vector<32x64xf32>, vector<2x32xf32> -> vector<2x32xf32>
    %c0_3 = arith.constant 0 : index
    %c0_4 = arith.constant 0 : index
    %3 = vector.load %arg3[%c0_3, %c0_4] : memref<1x32xf32, #tpu.memory_space<vmem>>, vector<1x32xf32>
    %4 = vector.broadcast %3 : vector<1x32xf32> to vector<2x32xf32>
    %5 = arith.addf %2, %4 : vector<2x32xf32>
    %c0_5 = arith.constant 0 : index
    %c0_6 = arith.constant 0 : index
    %6 = vector.load %arg4[%c0_5, %c0_6] : memref<32x64xf32, #tpu.memory_space<vmem>>, vector<32x64xf32>
    %cst_7 = arith.constant dense<0.000000e+00> : vector<2x32xf32>
    %7 = tpu.matmul %0, %6, %cst_7 {dimension_numbers = #tpu.dot_dimension_numbers<[1], [1], [0], [0], [0, 0, 1, 0], [], []>} : vector<2x64xf32>, vector<32x64xf32>, vector<2x32xf32> -> vector<2x32xf32>
    %c0_8 = arith.constant 0 : index
    %c0_9 = arith.constant 0 : index
    %8 = vector.load %arg5[%c0_8, %c0_9] : memref<1x32xf32, #tpu.memory_space<vmem>>, vector<1x32xf32>
    %9 = vector.broadcast %8 : vector<1x32xf32> to vector<2x32xf32>
    %10 = arith.addf %7, %9 : vector<2x32xf32>
    %c0_10 = arith.constant 0 : index
    %c0_11 = arith.constant 0 : index
    %11 = vector.load %arg6[%c0_10, %c0_11] : memref<2x32xf32, #tpu.memory_space<vmem>>, vector<2x32xf32>
    tpu.vector_store %arg6[%c0_10, %c0_11], %5 {strides = array<i32>} : memref<2x32xf32, #tpu.memory_space<vmem>>, vector<2x32xf32>,
    %c0_12 = arith.constant 0 : index
    %c0_13 = arith.constant 0 : index
    %12 = vector.load %arg7[%c0_12, %c0_13] : memref<2x32xf32, #tpu.memory_space<vmem>>, vector<2x32xf32>
    tpu.vector_store %arg7[%c0_12, %c0_13], %10 {strides = array<i32>} : memref<2x32xf32, #tpu.memory_space<vmem>>, vector<2x32xf32>,
    return
  }
  func.func @transform_0(%arg0: i32) -> (i32, i32) {
    %c0_i32 = arith.constant 0 : i32
    %c0_i32_0 = arith.constant 0 : i32
    %c0_i32_1 = arith.constant 0 : i32
    return %c0_i32, %c0_i32_0 : i32, i32
  }
  func.func @transform_1(%arg0: i32) -> (i32, i32) {
    %c0_i32 = arith.constant 0 : i32
    %c0_i32_0 = arith.constant 0 : i32
    return %arg0, %c0_i32 : i32, i32
  }
  func.func @transform_2(%arg0: i32) -> (i32, i32) {
    %c0_i32 = arith.constant 0 : i32
    %c0_i32_0 = arith.constant 0 : i32
    return %c0_i32, %arg0 : i32, i32
  }
  func.func @transform_3(%arg0: i32) -> (i32, i32) {
    %c0_i32 = arith.constant 0 : i32
    %c0_i32_0 = arith.constant 0 : i32
    return %arg0, %c0_i32 : i32, i32
  }
  func.func @transform_4(%arg0: i32) -> (i32, i32) {
    %c0_i32 = arith.constant 0 : i32
    %c0_i32_0 = arith.constant 0 : i32
    return %c0_i32, %arg0 : i32, i32
  }
  func.func @transform_5(%arg0: i32) -> (i32, i32) {
    %c0_i32 = arith.constant 0 : i32
    %c0_i32_0 = arith.constant 0 : i32
    return %c0_i32, %arg0 : i32, i32
  }
  func.func @transform_6(%arg0: i32) -> (i32, i32) {
    %c0_i32 = arith.constant 0 : i32
    %c0_i32_0 = arith.constant 0 : i32
    return %c0_i32, %arg0 : i32, i32
  }
}

</mosaic_0001>

<llo_original>
// kernel: tpu_custom_call.1
$region0: #{tpu_custom_call.1}
  #allocation0 [shape = 'u32[]', space=smem, size = 0x4, offset = 0x4, fixed_abs, tag = 'smem constant byte address 0x4 - core index']
  #allocation1 [shape = 'u32[144,128]{1,0:T(1,128)}', space=vmem, size = 0x12000, scoped, tag = 'internal scratch']
  %s0 = inlined_call_operand.hbm [shape: f32[2,64], index: 0, kind: input, shape index: {}]
  %s1 = inlined_call_operand.hbm [shape: f32[32,64], index: 1, kind: input, shape index: {}]
  %s2 = inlined_call_operand.vmem [shape: f32[1,32], index: 2, kind: input, shape index: {}]
  %s3 = inlined_call_operand.hbm [shape: f32[32,64], index: 3, kind: input, shape index: {}]
  %s4 = inlined_call_operand.vmem [shape: f32[1,32], index: 4, kind: input, shape index: {}]
  %s5 = inlined_call_operand.hbm [shape: f32[2,32], index: 5, kind: output, shape index: {0}]
  %s6 = inlined_call_operand.hbm [shape: f32[2,32], index: 6, kind: output, shape index: {1}]
  %7 = xla_tuple %s5, %s6
  %s8 = sld [smem:[#allocation0]]
  $region50: #{tpu_custom_call.1} parent=0
    _
  %s10 = ssub.s32 1, %s8
  %s11 = scalar_select 0, %s10, %s8
  $region1: #{tpu_custom_call.1} parent=0
    #allocation2 [shape = 'u8[1024]{0}', space=vmem, size = 0x400, scoped, tag = 'input window, operand 0, single buffered']
    #allocation3 [shape = 's32[1]{0}', space=sflag, size = 0x4, scoped, tag = 'scoped memory for tpu_custom_call.1']
    #allocation4 [shape = 's32[1]{0}', space=sflag, size = 0x4, scoped, tag = 'scoped memory for tpu_custom_call.1']
    #allocation5 [shape = 'u8[16384]{0}', space=vmem, size = 0x4000, scoped, tag = 'input window, operand 1, single buffered']
    #allocation6 [shape = 's32[1]{0}', space=sflag, size = 0x4, scoped, tag = 'scoped memory for tpu_custom_call.1']
    #allocation7 [shape = 'u8[16384]{0}', space=vmem, size = 0x4000, scoped, tag = 'input window, operand 3, single buffered']
    #allocation8 [shape = 'u8[1024]{0}', space=vmem, size = 0x400, scoped, tag = 'output window, operand 0, single buffered']
    #allocation9 [shape = 'u8[1024]{0}', space=vmem, size = 0x400, scoped, tag = 'output window, operand 1, single buffered']
    #allocation10 [shape = 's32[1]{0}', space=sflag, size = 0x4, scoped, tag = 'scoped memory for tpu_custom_call.1']
    %12 = vsyncpa [#allocation3], 0
    %13 = vsyncpa [#allocation6], 0
    %14 = vsyncpa [#allocation4], 0
    %15 = vsyncpa [#allocation10], 0
    // Predicated region
    $region2: #{tpu_custom_call.1} parent=1 // pred_check
      _
    $region3: #{tpu_custom_call.1} parent=1 // pred_check_branch
      %17 = sbr.rel (0) target = $region5
    $region4: #{tpu_custom_call.1} parent=1 // pred_region
      %s19 = ssub.s32 32, 32
      %20 = vsyncadd [#allocation3], %s19
      %s22 = sshll.u32 [#allocation2], 4
      %s23 = int_to_ptr.vmem [resolvable:$true] %s22
      %25 = dma.hbm_to_vmem [thread:$0]  %s0, 32, %s23, [#allocation3]
    $region5: #{tpu_custom_call.1} parent=1 // pred_fallthru
      _
    // Predicated region
    $region6: #{tpu_custom_call.1} parent=1 // pred_check
      _
    $region7: #{tpu_custom_call.1} parent=1 // pred_check_branch
      %27 = sbr.rel (0) target = $region9
    $region8: #{tpu_custom_call.1} parent=1 // pred_region
      %s29 = ssub.s32 512, 512
      %30 = vsyncadd [#allocation6], %s29
      %s31 = sshll.u32 [#allocation5], 4
      %s32 = int_to_ptr.vmem [resolvable:$true] %s31
      %37 = dma.hbm_to_vmem [thread:$0]  %s1, 512, %s32, [#allocation6], 128, 128, 8
    $region9: #{tpu_custom_call.1} parent=1 // pred_fallthru
      _
    // Predicated region
    $region10: #{tpu_custom_call.1} parent=1 // pred_check
      _
    $region11: #{tpu_custom_call.1} parent=1 // pred_check_branch
      %39 = sbr.rel (0) target = $region13
    $region12: #{tpu_custom_call.1} parent=1 // pred_region
      _
    $region13: #{tpu_custom_call.1} parent=1 // pred_fallthru
      _
    // Predicated region
    $region14: #{tpu_custom_call.1} parent=1 // pred_check
      _
    $region15: #{tpu_custom_call.1} parent=1 // pred_check_branch
      %41 = sbr.rel (0) target = $region17
    $region16: #{tpu_custom_call.1} parent=1 // pred_region
      %s43 = ssub.s32 512, 512
      %44 = vsyncadd [#allocation6], %s43
      %s45 = sshll.u32 [#allocation7], 4
      %s46 = int_to_ptr.vmem [resolvable:$true] %s45
      %51 = dma.hbm_to_vmem [thread:$0]  %s3, 512, %s46, [#allocation6], 128, 128, 8
    $region17: #{tpu_custom_call.1} parent=1 // pred_fallthru
      _
    // Predicated region
    $region18: #{tpu_custom_call.1} parent=1 // pred_check
      _
    $region19: #{tpu_custom_call.1} parent=1 // pred_check_branch
      %53 = sbr.rel (0) target = $region21
    $region20: #{tpu_custom_call.1} parent=1 // pred_region
      _
    $region21: #{tpu_custom_call.1} parent=1 // pred_fallthru
      _
    // Predicated region
    $region22: #{tpu_custom_call.1} parent=1 // pred_check
      _
    $region23: #{tpu_custom_call.1} parent=1 // pred_check_branch
      %55 = sbr.rel (0) target = $region25
    $region24: #{tpu_custom_call.1} parent=1 // pred_region
      %56 = dma.done [#allocation3], 32
    $region25: #{tpu_custom_call.1} parent=1 // pred_fallthru
      _
    // Predicated region
    $region26: #{tpu_custom_call.1} parent=1 // pred_check
      _
    $region27: #{tpu_custom_call.1} parent=1 // pred_check_branch
      %58 = sbr.rel (0) target = $region29
    $region28: #{tpu_custom_call.1} parent=1 // pred_region
      %59 = dma.done [#allocation6], 512
    $region29: #{tpu_custom_call.1} parent=1 // pred_fallthru
      _
    // Predicated region
    $region30: #{tpu_custom_call.1} parent=1 // pred_check
      _
    $region31: #{tpu_custom_call.1} parent=1 // pred_check_branch
      %61 = sbr.rel (0) target = $region33
    $region32: #{tpu_custom_call.1} parent=1 // pred_region
      %62 = dma.done [#allocation6], 512
    $region33: #{tpu_custom_call.1} parent=1 // pred_fallthru
      _
    %v63 = vld [vmem:[#allocation2] sm:$0x3]
    %v64 = vld [vmem:[#allocation5] sm:$0xff]
    %v65 = vld [vmem:[#allocation5 + $0x8] sm:$0xff]
    %v66 = vld [vmem:[#allocation5 + $0x10] sm:$0xff]
    %v67 = vld [vmem:[#allocation5 + $0x18] sm:$0xff]
    %v68 = vld [vmem:[%s2] sm:$0x1]
    %v70 = vlaneseq
    %v71 = vshrl.u32 %v70, 7
    %v72 = vsub.s32 0, %v71
    %v73 = vrot.slane %v68, %v72
    %vm75 = vcmask 523264
    %v77 = vsel %vm75, %v63, 0
    %v80 = vsel %vm75, %v64, 0
    %v83 = vsel %vm75, %v65, 0
    %v86 = vsel %vm75, %v66, 0
    %v89 = vsel %vm75, %v67, 0
    %91 = vmatprep.subr.mxu0 0.0
    %92 = vmatpush1.xpose.msra.mxu0 %v80
    %93 = vmatprep.subr.mxu0 0.0
    %94 = vmatpush1.xpose.msra.mxu0 %v83
    %95 = vmatprep.subr.mxu0 0.0
    %96 = vmatpush1.xpose.msra.mxu0 %v86
    %97 = vmatprep.subr.mxu0 0.0
    %98 = vmatpush1.xpose.msra.mxu0 %v89
    %99 = vmatprep.subr.mxu0 0.0
    %100 = vmatpush1.xpose.msra.mxu0 0.0
    %101 = vmatprep.subr.mxu0 0.0
    %102 = vmatpush1.xpose.msra.mxu0 0.0
    %103 = vmatprep.subr.mxu0 0.0
    %104 = vmatpush1.xpose.msra.mxu0 0.0
    %105 = vmatprep.subr.mxu0 0.0
    %106 = vmatpush1.xpose.msra.mxu0 0.0
    %107 = vmatprep.subr.mxu0 0.0
    %108 = vmatpush1.xpose.msra.mxu0 0.0
    %109 = vmatprep.subr.mxu0 0.0
    %110 = vmatpush1.xpose.msra.mxu0 0.0
    %111 = vmatprep.subr.mxu0 0.0
    %112 = vmatpush1.xpose.msra.mxu0 0.0
    %113 = vmatprep.subr.mxu0 0.0
    %114 = vmatpush1.xpose.msra.mxu0 0.0
    %115 = vmatprep.subr.mxu0 0.0
    %116 = vmatpush1.xpose.msra.mxu0 0.0
    %117 = vmatprep.subr.mxu0 0.0
    %118 = vmatpush1.xpose.msra.mxu0 0.0
    %119 = vmatprep.subr.mxu0 0.0
    %120 = vmatpush1.xpose.msra.mxu0 0.0
    %121 = vmatprep.subr.mxu0 0.0
    %122 = vmatpush1.xpose.msra.mxu0 0.0
    %123 = vmatprep.subr.mxu0 0.0
    %124 = vmatpush1.xpose.msra.mxu0 0.0
    %125 = vmatprep.subr.mxu0 0.0
    %126 = vmatpush1.xpose.msra.mxu0 0.0
    %127 = vmatprep.subr.mxu0 0.0
    %128 = vmatpush1.xpose.msra.mxu0 0.0
    %129 = vmatprep.subr.mxu0 0.0
    %130 = vmatpush1.xpose.msra.mxu0 0.0
    %131 = vmatprep.subr.mxu0 0.0
    %132 = vmatpush1.xpose.msra.mxu0 0.0
    %133 = vmatprep.subr.mxu0 0.0
    %134 = vmatpush1.xpose.msra.mxu0 0.0
    %135 = vmatprep.subr.mxu0 0.0
    %136 = vmatpush1.xpose.msra.mxu0 0.0
    %137 = vmatprep.subr.mxu0 0.0
    %138 = vmatpush1.xpose.msra.mxu0 0.0
    %139 = vmatprep.subr.mxu0 0.0
    %140 = vmatpush1.xpose.msra.mxu0 0.0
    %141 = vmatprep.subr.mxu0 0.0
    %142 = vmatpush1.xpose.msra.mxu0 0.0
    %143 = vmatprep.subr.mxu0 0.0
    %144 = vmatpush1.xpose.msra.mxu0 0.0
    %145 = vmatprep.subr.mxu0 0.0
    %146 = vmatpush1.xpose.msra.mxu0 0.0
    %147 = vmatprep.subr.mxu0 0.0
    %148 = vmatpush1.xpose.msra.mxu0 0.0
    %149 = vmatprep.subr.mxu0 0.0
    %150 = vmatpush1.xpose.msra.mxu0 0.0
    %151 = vmatprep.subr.mxu0 0.0
    %152 = vmatpush1.xpose.msra.mxu0 0.0
    %153 = vmatprep.subr.mxu0 0.0
    %154 = vmatpush1.xpose.msra.mxu0 0.0
    %155 = vmatprep.mubr.f32.mxu0 0.0
    %156 = vmatmul.mubr.f32.gmra.mrb[0].mxu0 %v77
    %v157 = vpop.f32.mrb[0].mxu0
    %v158 = vadd.f32 %v73, %v157
    %v159 = vpop.f32.mrb[0].mxu0
    %160 = vdwg.mxu0
    %v161 = vld [vmem:[#allocation7] sm:$0xff]
    %v162 = vld [vmem:[#allocation7 + $0x8] sm:$0xff]
    %v163 = vld [vmem:[#allocation7 + $0x10] sm:$0xff]
    %v164 = vld [vmem:[#allocation7 + $0x18] sm:$0xff]
    %v165 = vld [vmem:[%s4] sm:$0x1]
    %v167 = vlaneseq
    %v168 = vshrl.u32 %v167, 7
    %v169 = vsub.s32 0, %v168
    %v170 = vrot.slane %v165, %v169
    %v173 = vsel %vm75, %v161, 0
    %v176 = vsel %vm75, %v162, 0
    %v179 = vsel %vm75, %v163, 0
    %v182 = vsel %vm75, %v164, 0
    %184 = vmatprep.subr.mxu0 0.0
    %185 = vmatpush1.xpose.msra.mxu0 %v173
    %186 = vmatprep.subr.mxu0 0.0
    %187 = vmatpush1.xpose.msra.mxu0 %v176
    %188 = vmatprep.subr.mxu0 0.0
    %189 = vmatpush1.xpose.msra.mxu0 %v179
    %190 = vmatprep.subr.mxu0 0.0
    %191 = vmatpush1.xpose.msra.mxu0 %v182
    %192 = vmatprep.subr.mxu0 0.0
    %193 = vmatpush1.xpose.msra.mxu0 0.0
    %194 = vmatprep.subr.mxu0 0.0
    %195 = vmatpush1.xpose.msra.mxu0 0.0
    %196 = vmatprep.subr.mxu0 0.0
    %197 = vmatpush1.xpose.msra.mxu0 0.0
    %198 = vmatprep.subr.mxu0 0.0
    %199 = vmatpush1.xpose.msra.mxu0 0.0
    %200 = vmatprep.subr.mxu0 0.0
    %201 = vmatpush1.xpose.msra.mxu0 0.0
    %202 = vmatprep.subr.mxu0 0.0
    %203 = vmatpush1.xpose.msra.mxu0 0.0
    %204 = vmatprep.subr.mxu0 0.0
    %205 = vmatpush1.xpose.msra.mxu0 0.0
    %206 = vmatprep.subr.mxu0 0.0
    %207 = vmatpush1.xpose.msra.mxu0 0.0
    %208 = vmatprep.subr.mxu0 0.0
    %209 = vmatpush1.xpose.msra.mxu0 0.0
    %210 = vmatprep.subr.mxu0 0.0
    %211 = vmatpush1.xpose.msra.mxu0 0.0
    %212 = vmatprep.subr.mxu0 0.0
    %213 = vmatpush1.xpose.msra.mxu0 0.0
    %214 = vmatprep.subr.mxu0 0.0
    %215 = vmatpush1.xpose.msra.mxu0 0.0
    %216 = vmatprep.subr.mxu0 0.0
    %217 = vmatpush1.xpose.msra.mxu0 0.0
    %218 = vmatprep.subr.mxu0 0.0
    %219 = vmatpush1.xpose.msra.mxu0 0.0
    %220 = vmatprep.subr.mxu0 0.0
    %221 = vmatpush1.xpose.msra.mxu0 0.0
    %222 = vmatprep.subr.mxu0 0.0
    %223 = vmatpush1.xpose.msra.mxu0 0.0
    %224 = vmatprep.subr.mxu0 0.0
    %225 = vmatpush1.xpose.msra.mxu0 0.0
    %226 = vmatprep.subr.mxu0 0.0
    %227 = vmatpush1.xpose.msra.mxu0 0.0
    %228 = vmatprep.subr.mxu0 0.0
    %229 = vmatpush1.xpose.msra.mxu0 0.0
    %230 = vmatprep.subr.mxu0 0.0
    %231 = vmatpush1.xpose.msra.mxu0 0.0
    %232 = vmatprep.subr.mxu0 0.0
    %233 = vmatpush1.xpose.msra.mxu0 0.0
    %234 = vmatprep.subr.mxu0 0.0
    %235 = vmatpush1.xpose.msra.mxu0 0.0
    %236 = vmatprep.subr.mxu0 0.0
    %237 = vmatpush1.xpose.msra.mxu0 0.0
    %238 = vmatprep.subr.mxu0 0.0
    %239 = vmatpush1.xpose.msra.mxu0 0.0
    %240 = vmatprep.subr.mxu0 0.0
    %241 = vmatpush1.xpose.msra.mxu0 0.0
    %242 = vmatprep.subr.mxu0 0.0
    %243 = vmatpush1.xpose.msra.mxu0 0.0
    %244 = vmatprep.subr.mxu0 0.0
    %245 = vmatpush1.xpose.msra.mxu0 0.0
    %246 = vmatprep.subr.mxu0 0.0
    %247 = vmatpush1.xpose.msra.mxu0 0.0
    %248 = vmatprep.mubr.f32.mxu0 0.0
    %249 = vmatmul.mubr.f32.gmra.mrb[0].mxu0 %v77
    %v250 = vpop.f32.mrb[0].mxu0
    %v251 = vadd.f32 %v170, %v250
    %v252 = vpop.f32.mrb[0].mxu0
    %253 = vdwg.mxu0
    %vm254 = vcmask 254976
    %255 = vst.msk [vmem:[#allocation8] sm:$0x3] %vm254, %v158
    %256 = vst.msk [vmem:[#allocation9] sm:$0x3] %vm254, %v251
    // Predicated region
    $region34: #{tpu_custom_call.1} parent=1 // pred_check
      _
    $region35: #{tpu_custom_call.1} parent=1 // pred_check_branch
      %258 = sbr.rel (0) target = $region37
    $region36: #{tpu_custom_call.1} parent=1 // pred_region
      %s260 = ssub.s32 32, 32
      %261 = vsyncadd [#allocation4], %s260
      %s263 = sshll.u32 [#allocation8], 4
      %s264 = int_to_ptr.vmem [resolvable:$true] %s263
      %266 = dma.vmem_to_hbm [thread:$0]  %s264, 32, %s5, [#allocation4]
    $region37: #{tpu_custom_call.1} parent=1 // pred_fallthru
      _
    // Predicated region
    $region38: #{tpu_custom_call.1} parent=1 // pred_check
      _
    $region39: #{tpu_custom_call.1} parent=1 // pred_check_branch
      %268 = sbr.rel (0) target = $region41
    $region40: #{tpu_custom_call.1} parent=1 // pred_region
      %s270 = ssub.s32 32, 32
      %271 = vsyncadd [#allocation10], %s270
      %s273 = sshll.u32 [#allocation9], 4
      %s274 = int_to_ptr.vmem [resolvable:$true] %s273
      %276 = dma.vmem_to_hbm [thread:$0]  %s274, 32, %s6, [#allocation10]
    $region41: #{tpu_custom_call.1} parent=1 // pred_fallthru
      _
    // Predicated region
    $region42: #{tpu_custom_call.1} parent=1 // pred_check
      _
    $region43: #{tpu_custom_call.1} parent=1 // pred_check_branch
      %278 = sbr.rel (0) target = $region45
    $region44: #{tpu_custom_call.1} parent=1 // pred_region
      %279 = dma.done [#allocation4], 32
    $region45: #{tpu_custom_call.1} parent=1 // pred_fallthru
      _
    // Predicated region
    $region46: #{tpu_custom_call.1} parent=1 // pred_check
      _
    $region47: #{tpu_custom_call.1} parent=1 // pred_check_branch
      %281 = sbr.rel (0) target = $region49
    $region48: #{tpu_custom_call.1} parent=1 // pred_region
      %282 = dma.done [#allocation10], 32
    $region49: #{tpu_custom_call.1} parent=1 // pred_fallthru
      _
    %283 = vsyncpa [#allocation3], 1
    %284 = vsyncpa [#allocation6], 1
    %285 = vsyncpa [#allocation4], 1
    %286 = vsyncpa [#allocation10], 1

</llo_original>
